<compile_context>
chip_gen: v5e
topology: v5e:2x2
jax: 0.10.0
libtpu: 0.0.40
codegen_flags: <defaults>
</compile_context>

<pallas_src>
import math

import jax
import jax.numpy as jnp
from jax.experimental import pallas as pl
from jax.experimental.pallas import tpu as pltpu


def _round_up(x, m):
    return ((x + m - 1) // m) * m


def _actor_kernel(x_ref, w1_ref, b1_ref, w2_ref, b2_ref,
                  w3_ref, b3_ref, w4_ref, b4_ref, o_ref):
    # bf16 operands feed the MXU at native rate; accumulation + biases are f32.
    xb = x_ref[...].astype(jnp.bfloat16)
    h = jnp.dot(xb, w1_ref[...], preferred_element_type=jnp.float32)
    h = jnp.maximum(h + b1_ref[...], 0.0).astype(jnp.bfloat16)
    h = jnp.dot(h, w2_ref[...], preferred_element_type=jnp.float32)
    h = jnp.maximum(h + b2_ref[...], 0.0).astype(jnp.bfloat16)
    h = jnp.dot(h, w3_ref[...], preferred_element_type=jnp.float32)
    h = jnp.maximum(h + b3_ref[...], 0.0).astype(jnp.bfloat16)
    z = jnp.dot(h, w4_ref[...], preferred_element_type=jnp.float32)
    # ActorNetwork applies ReLU to the output layer as well (before softmax).
    o_ref[...] = jnp.maximum(z + b4_ref[...], 0.0).astype(o_ref.dtype)


def prepare_params(params, size, action_dist):
    """One-time prep: transpose PyTorch (out,in) weights to (in,out), zero-pad
    to lane-aligned widths, cast weights to bf16 (biases stay f32).

    Padded rows/cols and biases are zero, so padding never leaks into real
    outputs. The first layer keeps its natural `size`-row contraction dim
    because x is fed unpadded.
    """
    s_pad = _round_up(size, 128)          # hidden width 81 -> 128
    a_pad = _round_up(action_dist, 128)   # action width 729 -> 768
    w1, b1, w2, b2, w3, b3, w4, b4 = params

    def pad_lin(w, b, in_pad, out_pad):
        wt = jnp.asarray(w, jnp.float32).T                       # (in, out)
        wt = jnp.pad(wt, ((0, in_pad - wt.shape[0]),
                          (0, out_pad - wt.shape[1])))           # zero pad
        br = jnp.pad(jnp.asarray(b, jnp.float32),
                     (0, out_pad - b.shape[0])).reshape(1, out_pad)
        return wt.astype(jnp.bfloat16), br

    w1t, b1r = pad_lin(w1, b1, size, s_pad)     # (81, 128)  — K stays 81
    w2t, b2r = pad_lin(w2, b2, s_pad, s_pad)    # (128, 128)
    w3t, b3r = pad_lin(w3, b3, s_pad, s_pad)    # (128, 128)
    w4t, b4r = pad_lin(w4, b4, s_pad, a_pad)    # (128, 768)
    return (w1t, b1r, w2t, b2r, w3t, b3r, w4t, b4r)


def actor_network_forward(x, prepared, action_spec, *, block_b=512):
    """x: (B, *obs_shape) float32. Returns (B, *action_spec) softmax probs (f32)."""
    w1t, b1r, w2t, b2r, w3t, b3r, w4t, b4r = prepared
    s_in = w1t.shape[0]          # 81  (unpadded contraction dim of layer 1)
    s_pad = w2t.shape[0]         # 128
    a_pad = w4t.shape[1]         # 768
    action_dist = int(math.prod(action_spec))

    B = x.shape[0]
    x_flat = x.reshape(B, -1)    # nn.Flatten(); no pad, no dtype copy
    assert x_flat.shape[1] == s_in

    # Batch tile: >=2 grid steps once B >= 16 (v7x megacore), capped at
    # block_b rows for large-batch throughput; multiple of 8 (f32 sublanes).
    tb = min(block_b, max(8, _round_up((B + 1) // 2, 8)))
    grid = (pl.cdiv(B, tb),)     # partial last block: garbage rows are per-row
                                 # independent and masked off on writeback.

    # Weights/biases stay VMEM-resident across all grid steps (fixed block idx).
    resident = lambda shape: pl.BlockSpec(shape, lambda i: (0, 0))

    out = pl.pallas_call(
        _actor_kernel,
        out_shape=jax.ShapeDtypeStruct((B, a_pad), jnp.bfloat16),
        grid=grid,
        in_specs=[
            pl.BlockSpec((tb, s_in), lambda i: (i, 0)),          # x tile streams
            resident((s_in, s_pad)), resident((1, s_pad)),       # input_layer
            resident((s_pad, s_pad)), resident((1, s_pad)),      # dense_one
            resident((s_pad, s_pad)), resident((1, s_pad)),      # dense_two
            resident((s_pad, a_pad)), resident((1, a_pad)),      # output
        ],
        out_specs=pl.BlockSpec((tb, a_pad), lambda i: (i, 0)),   # lane-dense store
        compiler_params=pltpu.CompilerParams(
            dimension_semantics=("parallel",)),
    )(x_flat, w1t, b1r, w2t, b2r, w3t, b3r, w4t, b4r)

    z = out[:, :action_dist].astype(jnp.float32)                 # drop lane pad
    z = z.reshape((B,) + tuple(action_spec))                     # torch.unflatten
    return jax.nn.softmax(z, axis=-1)                            # F.softmax(x, -1)


def init_params(key, size, action_dist):
    """Deterministic PyTorch-Linear-style init: U(-1/sqrt(in), 1/sqrt(in))."""
    keys = jax.random.split(key, 8)

    def lin(kw, kb, fan_in, fan_out):
        bound = 1.0 / jnp.sqrt(jnp.float32(fan_in))
        w = jax.random.uniform(kw, (fan_out, fan_in), jnp.float32, -bound, bound)
        b = jax.random.uniform(kb, (fan_out,), jnp.float32, -bound, bound)
        return w, b

    w1, b1 = lin(keys[0], keys[1], size, size)           # input_layer: LazyLinear(81)
    w2, b2 = lin(keys[2], keys[3], size, size)           # dense_one
    w3, b3 = lin(keys[4], keys[5], size, size)           # dense_two
    w4, b4 = lin(keys[6], keys[7], size, action_dist)    # output
    return (w1, b1, w2, b2, w3, b3, w4, b4)


if __name__ == "__main__":
    key = jax.random.PRNGKey(0)
    k_x, k_p = jax.random.split(key)

    # Sudoku observation after UnsqueezeTransform + DoubleToFloat: (1, 9, 9).
    B = 4
    obs = jax.random.uniform(k_x, (B, 1, 9, 9), jnp.float32)
    size = obs.reshape(B, -1).shape[1]                   # 81
    action_spec = (9, 9, 9)                              # sudoku (row, col, digit)
    action_dist = int(math.prod(action_spec))            # 729

    params = init_params(k_p, size, action_dist)
    prepared = prepare_params(params, size, action_dist)

    # Plain-JAX f32 reference matching the PyTorch module.
    def ref_forward(x, params):
        w1, b1, w2, b2, w3, b3, w4, b4 = params
        h = x.reshape(x.shape[0], -1)
        h = jnp.maximum(h @ w1.T + b1, 0.0)
        h = jnp.maximum(h @ w2.T + b2, 0.0)
        h = jnp.maximum(h @ w3.T + b3, 0.0)
        h = jnp.maximum(h @ w4.T + b4, 0.0)
        h = h.reshape((x.shape[0],) + action_spec)
        return jax.nn.softmax(h, axis=-1)

    fwd = jax.jit(lambda x: actor_network_forward(x, prepared, action_spec))
    out = jax.block_until_ready(fwd(obs))
    ref = ref_forward(obs, params)
    assert out.shape == (B,) + action_spec, out.shape
    # bf16 weights/activations (f32 accumulation): loose-but-tight-enough tolerance.
    assert jnp.allclose(out, ref, atol=2e-2, rtol=5e-2), \
        float(jnp.max(jnp.abs(out - ref)))
    assert jnp.allclose(out.sum(-1), 1.0, atol=1e-4)

    # Second check: multi-step grid + partial last block (B=20 -> tb=16, grid=2).
    B2 = 20
    obs2 = jax.random.uniform(jax.random.PRNGKey(1), (B2, 1, 9, 9), jnp.float32)
    fwd2 = jax.jit(lambda x: actor_network_forward(x, prepared, action_spec))
    out2 = jax.block_until_ready(fwd2(obs2))
    ref2 = ref_forward(obs2, params)
    assert out2.shape == (B2,) + action_spec, out2.shape
    assert jnp.allclose(out2, ref2, atol=2e-2, rtol=5e-2), \
        float(jnp.max(jnp.abs(out2 - ref2)))

    print("KERNEL_OK")
</pallas_src>

<mosaic_0001>
module attributes {stable_mosaic.version = 11 : i64} {
  func.func @_actor_kernel(%arg0: i32, %arg1: memref<8x81xf32, #tpu.memory_space<vmem>>, %arg2: memref<81x128xbf16, #tpu.memory_space<vmem>>, %arg3: memref<1x128xf32, #tpu.memory_space<vmem>>, %arg4: memref<128x128xbf16, #tpu.memory_space<vmem>>, %arg5: memref<1x128xf32, #tpu.memory_space<vmem>>, %arg6: memref<128x128xbf16, #tpu.memory_space<vmem>>, %arg7: memref<1x128xf32, #tpu.memory_space<vmem>>, %arg8: memref<128x768xbf16, #tpu.memory_space<vmem>>, %arg9: memref<1x768xf32, #tpu.memory_space<vmem>>, %arg10: memref<8x768xbf16, #tpu.memory_space<vmem>>) attributes {dimension_semantics = [#tpu.dimension_semantics<parallel>], iteration_bounds = array<i64: 1>, scalar_prefetch = 0 : i64, scratch_operands = 0 : i64, tpu.core_type = #tpu.core_type<tc>, window_params = [{transform_indices = @transform_0, window_bounds = array<i64: 8, 81>}, {pipeline_mode = #tpu.pipeline_mode<synchronous>, transform_indices = @transform_1, window_bounds = array<i64: 81, 128>}, {pipeline_mode = #tpu.pipeline_mode<synchronous>, transform_indices = @transform_2, window_bounds = array<i64: 1, 128>}, {pipeline_mode = #tpu.pipeline_mode<synchronous>, transform_indices = @transform_3, window_bounds = array<i64: 128, 128>}, {pipeline_mode = #tpu.pipeline_mode<synchronous>, transform_indices = @transform_4, window_bounds = array<i64: 1, 128>}, {pipeline_mode = #tpu.pipeline_mode<synchronous>, transform_indices = @transform_5, window_bounds = array<i64: 128, 128>}, {pipeline_mode = #tpu.pipeline_mode<synchronous>, transform_indices = @transform_6, window_bounds = array<i64: 1, 128>}, {pipeline_mode = #tpu.pipeline_mode<synchronous>, transform_indices = @transform_7, window_bounds = array<i64: 128, 768>}, {pipeline_mode = #tpu.pipeline_mode<synchronous>, transform_indices = @transform_8, window_bounds = array<i64: 1, 768>}, {transform_indices = @transform_9, window_bounds = array<i64: 8, 768>}]} {
    %c0 = arith.constant 0 : index
    %c0_0 = arith.constant 0 : index
    %0 = vector.load %arg1[%c0, %c0_0] : memref<8x81xf32, #tpu.memory_space<vmem>>, vector<8x81xf32>
    %1 = arith.truncf %0 : vector<8x81xf32> to vector<8x81xbf16>
    %c0_1 = arith.constant 0 : index
    %c0_2 = arith.constant 0 : index
    %2 = vector.load %arg2[%c0_1, %c0_2] : memref<81x128xbf16, #tpu.memory_space<vmem>>, vector<81x128xbf16>
    %cst = arith.constant dense<0.000000e+00> : vector<8x128xf32>
    %3 = tpu.matmul %1, %2, %cst {dimension_numbers = #tpu.dot_dimension_numbers<[1], [0], [0], [1], [0, 0, 1, 1], [], []>} : vector<8x81xbf16>, vector<81x128xbf16>, vector<8x128xf32> -> vector<8x128xf32>
    %c0_3 = arith.constant 0 : index
    %c0_4 = arith.constant 0 : index
    %4 = vector.load %arg3[%c0_3, %c0_4] : memref<1x128xf32, #tpu.memory_space<vmem>>, vector<1x128xf32>
    %5 = vector.broadcast %4 : vector<1x128xf32> to vector<8x128xf32>
    %6 = arith.addf %3, %5 : vector<8x128xf32>
    %cst_5 = arith.constant 0.000000e+00 : f32
    %7 = vector.broadcast %cst_5 : f32 to vector<8x128xf32>
    %8 = arith.maximumf %6, %7 : vector<8x128xf32>
    %9 = arith.truncf %8 : vector<8x128xf32> to vector<8x128xbf16>
    %c0_6 = arith.constant 0 : index
    %c0_7 = arith.constant 0 : index
    %10 = vector.load %arg4[%c0_6, %c0_7] : memref<128x128xbf16, #tpu.memory_space<vmem>>, vector<128x128xbf16>
    %cst_8 = arith.constant dense<0.000000e+00> : vector<8x128xf32>
    %11 = tpu.matmul %9, %10, %cst_8 {dimension_numbers = #tpu.dot_dimension_numbers<[1], [0], [0], [1], [0, 0, 1, 1], [], []>} : vector<8x128xbf16>, vector<128x128xbf16>, vector<8x128xf32> -> vector<8x128xf32>
    %c0_9 = arith.constant 0 : index
    %c0_10 = arith.constant 0 : index
    %12 = vector.load %arg5[%c0_9, %c0_10] : memref<1x128xf32, #tpu.memory_space<vmem>>, vector<1x128xf32>
    %13 = vector.broadcast %12 : vector<1x128xf32> to vector<8x128xf32>
    %14 = arith.addf %11, %13 : vector<8x128xf32>
    %cst_11 = arith.constant 0.000000e+00 : f32
    %15 = vector.broadcast %cst_11 : f32 to vector<8x128xf32>
    %16 = arith.maximumf %14, %15 : vector<8x128xf32>
    %17 = arith.truncf %16 : vector<8x128xf32> to vector<8x128xbf16>
    %c0_12 = arith.constant 0 : index
    %c0_13 = arith.constant 0 : index
    %18 = vector.load %arg6[%c0_12, %c0_13] : memref<128x128xbf16, #tpu.memory_space<vmem>>, vector<128x128xbf16>
    %cst_14 = arith.constant dense<0.000000e+00> : vector<8x128xf32>
    %19 = tpu.matmul %17, %18, %cst_14 {dimension_numbers = #tpu.dot_dimension_numbers<[1], [0], [0], [1], [0, 0, 1, 1], [], []>} : vector<8x128xbf16>, vector<128x128xbf16>, vector<8x128xf32> -> vector<8x128xf32>
    %c0_15 = arith.constant 0 : index
    %c0_16 = arith.constant 0 : index
    %20 = vector.load %arg7[%c0_15, %c0_16] : memref<1x128xf32, #tpu.memory_space<vmem>>, vector<1x128xf32>
    %21 = vector.broadcast %20 : vector<1x128xf32> to vector<8x128xf32>
    %22 = arith.addf %19, %21 : vector<8x128xf32>
    %cst_17 = arith.constant 0.000000e+00 : f32
    %23 = vector.broadcast %cst_17 : f32 to vector<8x128xf32>
    %24 = arith.maximumf %22, %23 : vector<8x128xf32>
    %25 = arith.truncf %24 : vector<8x128xf32> to vector<8x128xbf16>
    %c0_18 = arith.constant 0 : index
    %c0_19 = arith.constant 0 : index
    %26 = vector.load %arg8[%c0_18, %c0_19] : memref<128x768xbf16, #tpu.memory_space<vmem>>, vector<128x768xbf16>
    %cst_20 = arith.constant dense<0.000000e+00> : vector<8x768xf32>
    %27 = tpu.matmul %25, %26, %cst_20 {dimension_numbers = #tpu.dot_dimension_numbers<[1], [0], [0], [1], [0, 0, 1, 1], [], []>} : vector<8x128xbf16>, vector<128x768xbf16>, vector<8x768xf32> -> vector<8x768xf32>
    %c0_21 = arith.constant 0 : index
    %c0_22 = arith.constant 0 : index
    %28 = vector.load %arg9[%c0_21, %c0_22] : memref<1x768xf32, #tpu.memory_space<vmem>>, vector<1x768xf32>
    %29 = vector.broadcast %28 : vector<1x768xf32> to vector<8x768xf32>
    %30 = arith.addf %27, %29 : vector<8x768xf32>
    %cst_23 = arith.constant 0.000000e+00 : f32
    %31 = vector.broadcast %cst_23 : f32 to vector<8x768xf32>
    %32 = arith.maximumf %30, %31 : vector<8x768xf32>
    %33 = arith.truncf %32 : vector<8x768xf32> to vector<8x768xbf16>
    %c0_24 = arith.constant 0 : index
    %c0_25 = arith.constant 0 : index
    %34 = vector.load %arg10[%c0_24, %c0_25] : memref<8x768xbf16, #tpu.memory_space<vmem>>, vector<8x768xbf16>
    tpu.vector_store %arg10[%c0_24, %c0_25], %33 {strides = array<i32>} : memref<8x768xbf16, #tpu.memory_space<vmem>>, vector<8x768xbf16>,
    return
  }
  func.func @transform_0(%arg0: i32) -> (i32, i32) {
    %c0_i32 = arith.constant 0 : i32
    %c0_i32_0 = arith.constant 0 : i32
    return %arg0, %c0_i32 : i32, i32
  }
  func.func @transform_1(%arg0: i32) -> (i32, i32) {
    %c0_i32 = arith.constant 0 : i32
    %c0_i32_0 = arith.constant 0 : i32
    %c0_i32_1 = arith.constant 0 : i32
    return %c0_i32, %c0_i32_0 : i32, i32
  }
  func.func @transform_2(%arg0: i32) -> (i32, i32) {
    %c0_i32 = arith.constant 0 : i32
    %c0_i32_0 = arith.constant 0 : i32
    %c0_i32_1 = arith.constant 0 : i32
    return %c0_i32, %c0_i32_0 : i32, i32
  }
  func.func @transform_3(%arg0: i32) -> (i32, i32) {
    %c0_i32 = arith.constant 0 : i32
    %c0_i32_0 = arith.constant 0 : i32
    %c0_i32_1 = arith.constant 0 : i32
    return %c0_i32, %c0_i32_0 : i32, i32
  }
  func.func @transform_4(%arg0: i32) -> (i32, i32) {
    %c0_i32 = arith.constant 0 : i32
    %c0_i32_0 = arith.constant 0 : i32
    %c0_i32_1 = arith.constant 0 : i32
    return %c0_i32, %c0_i32_0 : i32, i32
  }
  func.func @transform_5(%arg0: i32) -> (i32, i32) {
    %c0_i32 = arith.constant 0 : i32
    %c0_i32_0 = arith.constant 0 : i32
    %c0_i32_1 = arith.constant 0 : i32
    return %c0_i32, %c0_i32_0 : i32, i32
  }
  func.func @transform_6(%arg0: i32) -> (i32, i32) {
    %c0_i32 = arith.constant 0 : i32
    %c0_i32_0 = arith.constant 0 : i32
    %c0_i32_1 = arith.constant 0 : i32
    return %c0_i32, %c0_i32_0 : i32, i32
  }
  func.func @transform_7(%arg0: i32) -> (i32, i32) {
    %c0_i32 = arith.constant 0 : i32
    %c0_i32_0 = arith.constant 0 : i32
    %c0_i32_1 = arith.constant 0 : i32
    return %c0_i32, %c0_i32_0 : i32, i32
  }
  func.func @transform_8(%arg0: i32) -> (i32, i32) {
    %c0_i32 = arith.constant 0 : i32
    %c0_i32_0 = arith.constant 0 : i32
    %c0_i32_1 = arith.constant 0 : i32
    return %c0_i32, %c0_i32_0 : i32, i32
  }
  func.func @transform_9(%arg0: i32) -> (i32, i32) {
    %c0_i32 = arith.constant 0 : i32
    %c0_i32_0 = arith.constant 0 : i32
    return %arg0, %c0_i32 : i32, i32
  }
}

</mosaic_0001>

<llo_original>
// kernel: _lambda_.1
$region0: #{_lambda_.1}
  #allocation0 [shape = 'u32[]', space=smem, size = 0x4, offset = 0x4, fixed_abs, tag = 'smem constant byte address 0x4 - core index']
  #allocation1 [shape = 'u32[72,128]{1,0:T(1,128)}', space=vmem, size = 0x9000, scoped, tag = 'internal scratch']
  %s0 = inlined_call_operand.vmem [shape: f32[4,81], index: 0, kind: input, shape index: {}]
  %s1 = inlined_call_operand.hbm [shape: bf16[81,128], index: 1, kind: input, shape index: {}]
  %s2 = inlined_call_operand.vmem [shape: f32[1,128], index: 2, kind: input, shape index: {}]
  %s3 = inlined_call_operand.vmem [shape: bf16[128,128], index: 3, kind: input, shape index: {}]
  %s4 = inlined_call_operand.vmem [shape: f32[1,128], index: 4, kind: input, shape index: {}]
  %s5 = inlined_call_operand.vmem [shape: bf16[128,128], index: 5, kind: input, shape index: {}]
  %s6 = inlined_call_operand.vmem [shape: f32[1,128], index: 6, kind: input, shape index: {}]
  %s7 = inlined_call_operand.hbm [shape: bf16[128,768], index: 7, kind: input, shape index: {}]
  %s8 = inlined_call_operand.vmem [shape: f32[1,768], index: 8, kind: input, shape index: {}]
  %s9 = inlined_call_operand.vmem [shape: bf16[4,768], index: 9, kind: output, shape index: {}]
  %s10 = sld [smem:[#allocation0]]
  $region76: #{_lambda_.1} parent=0
    _
  %s12 = ssub.s32 1, %s10
  %s13 = scalar_select 0, %s12, %s10
  $region1: #{_lambda_.1} parent=0
    #allocation2 [shape = 'u8[22528]{0}', space=vmem, size = 0x5800, scoped, tag = 'input window, operand 1, single buffered']
    #allocation3 [shape = 's32[1]{0}', space=sflag, size = 0x4, scoped, tag = 'scoped memory for _lambda_.1']
    #allocation4 [shape = 'u8[196608]{0}', space=vmem, size = 0x30000, scoped, tag = 'input window, operand 7, single buffered']
    #allocation5 [shape = 's32[1]{0}', space=sflag, size = 0x4, scoped, tag = 'scoped memory for _lambda_.1']
    #allocation6 [shape = 'u8[12288]{0}', space=vmem, size = 0x3000, scoped, tag = 'output window, operand 0, single buffered']
    %14 = vsyncpa [#allocation3], 0
    %15 = vsyncpa [#allocation5], 0
    // Predicated region
    $region2: #{_lambda_.1} parent=1 // pred_check
      _
    $region3: #{_lambda_.1} parent=1 // pred_check_branch
      %17 = sbr.rel (0) target = $region5
    $region4: #{_lambda_.1} parent=1 // pred_region
      _
    $region5: #{_lambda_.1} parent=1 // pred_fallthru
      _
    // Predicated region
    $region6: #{_lambda_.1} parent=1 // pred_check
      _
    $region7: #{_lambda_.1} parent=1 // pred_check_branch
      %19 = sbr.rel (0) target = $region9
    $region8: #{_lambda_.1} parent=1 // pred_region
      %21 = vsyncadd [#allocation3], 0
      %s22 = sshll.u32 %s1, 4
      %s23 = int_to_ptr.hbm [resolvable:$true] %s22
      %s24 = sshll.u32 [#allocation2], 4
      %s25 = int_to_ptr.vmem [resolvable:$true] %s24
      %30 = dma.hbm_to_vmem [thread:$0]  %s23, 704, %s25, [#allocation3], 64, 64, 4
    $region9: #{_lambda_.1} parent=1 // pred_fallthru
      _
    // Predicated region
    $region10: #{_lambda_.1} parent=1 // pred_check
      _
    $region11: #{_lambda_.1} parent=1 // pred_check_branch
      %32 = sbr.rel (0) target = $region13
    $region12: #{_lambda_.1} parent=1 // pred_region
      _
    $region13: #{_lambda_.1} parent=1 // pred_fallthru
      _
    // Predicated region
    $region14: #{_lambda_.1} parent=1 // pred_check
      _
    $region15: #{_lambda_.1} parent=1 // pred_check_branch
      %34 = sbr.rel (0) target = $region17
    $region16: #{_lambda_.1} parent=1 // pred_region
      _
    $region17: #{_lambda_.1} parent=1 // pred_fallthru
      _
    // Predicated region
    $region18: #{_lambda_.1} parent=1 // pred_check
      _
    $region19: #{_lambda_.1} parent=1 // pred_check_branch
      %36 = sbr.rel (0) target = $region21
    $region20: #{_lambda_.1} parent=1 // pred_region
      _
    $region21: #{_lambda_.1} parent=1 // pred_fallthru
      _
    // Predicated region
    $region22: #{_lambda_.1} parent=1 // pred_check
      _
    $region23: #{_lambda_.1} parent=1 // pred_check_branch
      %38 = sbr.rel (0) target = $region25
    $region24: #{_lambda_.1} parent=1 // pred_region
      _
    $region25: #{_lambda_.1} parent=1 // pred_fallthru
      _
    // Predicated region
    $region26: #{_lambda_.1} parent=1 // pred_check
      _
    $region27: #{_lambda_.1} parent=1 // pred_check_branch
      %40 = sbr.rel (0) target = $region29
    $region28: #{_lambda_.1} parent=1 // pred_region
      _
    $region29: #{_lambda_.1} parent=1 // pred_fallthru
      _
    // Predicated region
    $region30: #{_lambda_.1} parent=1 // pred_check
      _
    $region31: #{_lambda_.1} parent=1 // pred_check_branch
      %42 = sbr.rel (0) target = $region33
    $region32: #{_lambda_.1} parent=1 // pred_region
      %44 = vsyncadd [#allocation5], 0
      %s45 = sshll.u32 %s7, 4
      %s46 = int_to_ptr.hbm [resolvable:$true] %s45
      %s47 = sshll.u32 [#allocation4], 4
      %s48 = int_to_ptr.vmem [resolvable:$true] %s47
      %53 = dma.hbm_to_vmem [thread:$0]  %s46, 6144, %s48, [#allocation5], 384, 384, 24
    $region33: #{_lambda_.1} parent=1 // pred_fallthru
      _
    // Predicated region
    $region34: #{_lambda_.1} parent=1 // pred_check
      _
    $region35: #{_lambda_.1} parent=1 // pred_check_branch
      %55 = sbr.rel (0) target = $region37
    $region36: #{_lambda_.1} parent=1 // pred_region
      _
    $region37: #{_lambda_.1} parent=1 // pred_fallthru
      _
    // Predicated region
    $region38: #{_lambda_.1} parent=1 // pred_check
      _
    $region39: #{_lambda_.1} parent=1 // pred_check_branch
      %57 = sbr.rel (0) target = $region41
    $region40: #{_lambda_.1} parent=1 // pred_region
      %59 = dma.done [#allocation3], 704
    $region41: #{_lambda_.1} parent=1 // pred_fallthru
      _
    // Predicated region
    $region42: #{_lambda_.1} parent=1 // pred_check
      _
    $region43: #{_lambda_.1} parent=1 // pred_check_branch
      %61 = sbr.rel (0) target = $region45
    $region44: #{_lambda_.1} parent=1 // pred_region
      %63 = dma.done [#allocation5], 6144
    $region45: #{_lambda_.1} parent=1 // pred_fallthru
      _
    %v65 = vld [vmem:[%s0] sm:$0xff]
    %v66 = vpack.c.bf16 %v65, %v65
    %v67 = vld [vmem:[#allocation2] sm:$0xf]
    %v68 = vld [vmem:[#allocation2 + $0x4] sm:$0xf]
    %v69 = vld [vmem:[#allocation2 + $0x8] sm:$0xf]
    %v70 = vld [vmem:[#allocation2 + $0xc] sm:$0xf]
    %v71 = vld [vmem:[#allocation2 + $0x10] sm:$0xf]
    %v72 = vld [vmem:[#allocation2 + $0x14] sm:$0xf]
    %v73 = vld [vmem:[#allocation2 + $0x18] sm:$0xf]
    %v74 = vld [vmem:[#allocation2 + $0x1c] sm:$0xf]
    %v75 = vld [vmem:[#allocation2 + $0x20] sm:$0xf]
    %v76 = vld [vmem:[#allocation2 + $0x24] sm:$0xf]
    %v77 = vld [vmem:[#allocation2 + $0x28] sm:$0x1]
    %v78 = vld [vmem:[%s2] sm:$0x1]
    %v80 = vperm.slane %v78, 0
    %v93 = vunpack.c.l.b16 %v67
    %v94 = vunpack.c.l.b16 %v68
    %v95 = vunpack.c.l.b16 %v69
    %v96 = vunpack.c.l.b16 %v70
    %v97 = vunpack.c.l.b16 %v71
    %v98 = vunpack.c.l.b16 %v72
    %v99 = vunpack.c.l.b16 %v73
    %v100 = vunpack.c.l.b16 %v74
    %v101 = vunpack.c.l.b16 %v75
    %v102 = vunpack.c.l.b16 %v76
    %v103 = vunpack.c.l.b16 %v77
    %v104 = vpack.c.b16 %v94, %v93
    %v105 = vpack.c.b16 %v96, %v95
    %v106 = vpack.c.b16 %v98, %v97
    %v107 = vpack.c.b16 %v100, %v99
    %v108 = vpack.c.b16 %v102, %v101
    %v109 = vpack.c.b16 %v103, %v103
    %vm115 = vcmask 662528
    %v117 = vsel %vm115, %v66, 0
    %vm119 = vcmask 1040384
    %v120 = vsel 0, 4294967295, 65535
    %v121 = vsel %vm119, %v120, 0
    %v123 = vand.u32 %v109, %v121
    %125 = vmatpush.bf16.msra.mxu0 0
    %126 = vmatpush.bf16.msra.mxu0 0
    %127 = vmatpush.bf16.msra.mxu0 %v123
    %128 = vmatpush.bf16.msra.mxu0 %v108
    %129 = vmatpush.bf16.msra.mxu0 %v107
    %130 = vmatpush.bf16.msra.mxu0 %v106
    %131 = vmatpush.bf16.msra.mxu0 %v105
    %132 = vmatpush.bf16.msra.mxu0 %v104
    %133 = vmatmul.bf16.gmra.mxu0 %v117
    %v134 = vpop.f32.mrf.mxu0
    %v135 = vadd.f32 %v80, %v134
    %v136 = vpop.f32.mrf.mxu0
    %137 = vdwg.mxu0
    %v138 = vmax.f32 %v135, 0.0
    %v139 = vpack.c.bf16 %v138, %v138
    %v140 = vld [vmem:[%s3] sm:$0xf]
    %v141 = vld [vmem:[%s3 + $0x4] sm:$0xf]
    %v142 = vld [vmem:[%s3 + $0x8] sm:$0xf]
    %v143 = vld [vmem:[%s3 + $0xc] sm:$0xf]
    %v144 = vld [vmem:[%s3 + $0x10] sm:$0xf]
    %v145 = vld [vmem:[%s3 + $0x14] sm:$0xf]
    %v146 = vld [vmem:[%s3 + $0x18] sm:$0xf]
    %v147 = vld [vmem:[%s3 + $0x1c] sm:$0xf]
    %v148 = vld [vmem:[%s3 + $0x20] sm:$0xf]
    %v149 = vld [vmem:[%s3 + $0x24] sm:$0xf]
    %v150 = vld [vmem:[%s3 + $0x28] sm:$0xf]
    %v151 = vld [vmem:[%s3 + $0x2c] sm:$0xf]
    %v152 = vld [vmem:[%s3 + $0x30] sm:$0xf]
    %v153 = vld [vmem:[%s3 + $0x34] sm:$0xf]
    %v154 = vld [vmem:[%s3 + $0x38] sm:$0xf]
    %v155 = vld [vmem:[%s3 + $0x3c] sm:$0xf]
    %v156 = vld [vmem:[%s4] sm:$0x1]
    %v158 = vperm.slane %v156, 0
    %v176 = vunpack.c.l.b16 %v140
    %v177 = vunpack.c.l.b16 %v141
    %v178 = vunpack.c.l.b16 %v142
    %v179 = vunpack.c.l.b16 %v143
    %v180 = vunpack.c.l.b16 %v144
    %v181 = vunpack.c.l.b16 %v145
    %v182 = vunpack.c.l.b16 %v146
    %v183 = vunpack.c.l.b16 %v147
    %v184 = vunpack.c.l.b16 %v148
    %v185 = vunpack.c.l.b16 %v149
    %v186 = vunpack.c.l.b16 %v150
    %v187 = vunpack.c.l.b16 %v151
    %v188 = vunpack.c.l.b16 %v152
    %v189 = vunpack.c.l.b16 %v153
    %v190 = vunpack.c.l.b16 %v154
    %v191 = vunpack.c.l.b16 %v155
    %v192 = vpack.c.b16 %v177, %v176
    %v193 = vpack.c.b16 %v179, %v178
    %v194 = vpack.c.b16 %v181, %v180
    %v195 = vpack.c.b16 %v183, %v182
    %v196 = vpack.c.b16 %v185, %v184
    %v197 = vpack.c.b16 %v187, %v186
    %v198 = vpack.c.b16 %v189, %v188
    %v199 = vpack.c.b16 %v191, %v190
    %208 = vmatpush.bf16.msra.mxu0 %v199
    %209 = vmatpush.bf16.msra.mxu0 %v198
    %210 = vmatpush.bf16.msra.mxu0 %v197
    %211 = vmatpush.bf16.msra.mxu0 %v196
    %212 = vmatpush.bf16.msra.mxu0 %v195
    %213 = vmatpush.bf16.msra.mxu0 %v194
    %214 = vmatpush.bf16.msra.mxu0 %v193
    %215 = vmatpush.bf16.msra.mxu0 %v192
    %216 = vmatmul.bf16.gmra.mxu0 %v139
    %v217 = vpop.f32.mrf.mxu0
    %v218 = vadd.f32 %v158, %v217
    %v219 = vpop.f32.mrf.mxu0
    %220 = vdwg.mxu0
    %v221 = vmax.f32 %v218, 0.0
    %v222 = vpack.c.bf16 %v221, %v221
    %v223 = vld [vmem:[%s5] sm:$0xf]
    %v224 = vld [vmem:[%s5 + $0x4] sm:$0xf]
    %v225 = vld [vmem:[%s5 + $0x8] sm:$0xf]
    %v226 = vld [vmem:[%s5 + $0xc] sm:$0xf]
    %v227 = vld [vmem:[%s5 + $0x10] sm:$0xf]
    %v228 = vld [vmem:[%s5 + $0x14] sm:$0xf]
    %v229 = vld [vmem:[%s5 + $0x18] sm:$0xf]
    %v230 = vld [vmem:[%s5 + $0x1c] sm:$0xf]
    %v231 = vld [vmem:[%s5 + $0x20] sm:$0xf]
    %v232 = vld [vmem:[%s5 + $0x24] sm:$0xf]
    %v233 = vld [vmem:[%s5 + $0x28] sm:$0xf]
    %v234 = vld [vmem:[%s5 + $0x2c] sm:$0xf]
    %v235 = vld [vmem:[%s5 + $0x30] sm:$0xf]
    %v236 = vld [vmem:[%s5 + $0x34] sm:$0xf]
    %v237 = vld [vmem:[%s5 + $0x38] sm:$0xf]
    %v238 = vld [vmem:[%s5 + $0x3c] sm:$0xf]
    %v239 = vld [vmem:[%s6] sm:$0x1]
    %v241 = vperm.slane %v239, 0
    %v259 = vunpack.c.l.b16 %v223
    %v260 = vunpack.c.l.b16 %v224
    %v261 = vunpack.c.l.b16 %v225
    %v262 = vunpack.c.l.b16 %v226
    %v263 = vunpack.c.l.b16 %v227
    %v264 = vunpack.c.l.b16 %v228
    %v265 = vunpack.c.l.b16 %v229
    %v266 = vunpack.c.l.b16 %v230
    %v267 = vunpack.c.l.b16 %v231
    %v268 = vunpack.c.l.b16 %v232
    %v269 = vunpack.c.l.b16 %v233
    %v270 = vunpack.c.l.b16 %v234
    %v271 = vunpack.c.l.b16 %v235
    %v272 = vunpack.c.l.b16 %v236
    %v273 = vunpack.c.l.b16 %v237
    %v274 = vunpack.c.l.b16 %v238
    %v275 = vpack.c.b16 %v260, %v259
    %v276 = vpack.c.b16 %v262, %v261
    %v277 = vpack.c.b16 %v264, %v263
    %v278 = vpack.c.b16 %v266, %v265
    %v279 = vpack.c.b16 %v268, %v267
    %v280 = vpack.c.b16 %v270, %v269
    %v281 = vpack.c.b16 %v272, %v271
    %v282 = vpack.c.b16 %v274, %v273
    %291 = vmatpush.bf16.msra.mxu0 %v282
    %292 = vmatpush.bf16.msra.mxu0 %v281
    %293 = vmatpush.bf16.msra.mxu0 %v280
    %294 = vmatpush.bf16.msra.mxu0 %v279
    %295 = vmatpush.bf16.msra.mxu0 %v278
    %296 = vmatpush.bf16.msra.mxu0 %v277
    %297 = vmatpush.bf16.msra.mxu0 %v276
    %298 = vmatpush.bf16.msra.mxu0 %v275
    %299 = vmatmul.bf16.gmra.mxu0 %v222
    %v300 = vpop.f32.mrf.mxu0
    %v301 = vadd.f32 %v241, %v300
    %v302 = vpop.f32.mrf.mxu0
    %303 = vdwg.mxu0
    %v304 = vmax.f32 %v301, 0.0
    %v305 = vpack.c.bf16 %v304, %v304
    %v306 = vld [vmem:[#allocation4] sm:$0xff]
    %v307 = vld [vmem:[#allocation4 + $0x8] sm:$0xff]
    %v308 = vld [vmem:[#allocation4 + $0x10] sm:$0xff]
    %v309 = vld [vmem:[#allocation4 + $0x18] sm:$0xff]
    %v310 = vld [vmem:[#allocation4 + $0x20] sm:$0xff]
    %v311 = vld [vmem:[#allocation4 + $0x28] sm:$0xff]
    %v312 = vld [vmem:[#allocation4 + $0x30] sm:$0xff]
    %v313 = vld [vmem:[#allocation4 + $0x38] sm:$0xff]
    %v314 = vld [vmem:[#allocation4 + $0x40] sm:$0xff]
    %v315 = vld [vmem:[#allocation4 + $0x48] sm:$0xff]
    %v316 = vld [vmem:[#allocation4 + $0x50] sm:$0xff]
    %v317 = vld [vmem:[#allocation4 + $0x58] sm:$0xff]
    %v318 = vld [vmem:[#allocation4 + $0x60] sm:$0xff]
    %v319 = vld [vmem:[#allocation4 + $0x68] sm:$0xff]
    %v320 = vld [vmem:[#allocation4 + $0x70] sm:$0xff]
    %v321 = vld [vmem:[#allocation4 + $0x78] sm:$0xff]
    %v322 = vld [vmem:[#allocation4 + $0x80] sm:$0xff]
    %v323 = vld [vmem:[#allocation4 + $0x88] sm:$0xff]
    %v324 = vld [vmem:[#allocation4 + $0x90] sm:$0xff]
    %v325 = vld [vmem:[#allocation4 + $0x98] sm:$0xff]
    %v326 = vld [vmem:[#allocation4 + $0xa0] sm:$0xff]
    %v327 = vld [vmem:[#allocation4 + $0xa8] sm:$0xff]
    %v328 = vld [vmem:[#allocation4 + $0xb0] sm:$0xff]
    %v329 = vld [vmem:[#allocation4 + $0xb8] sm:$0xff]
    %v330 = vld [vmem:[#allocation4 + $0xc0] sm:$0xff]
    %v331 = vld [vmem:[#allocation4 + $0xc8] sm:$0xff]
    %v332 = vld [vmem:[#allocation4 + $0xd0] sm:$0xff]
    %v333 = vld [vmem:[#allocation4 + $0xd8] sm:$0xff]
    %v334 = vld [vmem:[#allocation4 + $0xe0] sm:$0xff]
    %v335 = vld [vmem:[#allocation4 + $0xe8] sm:$0xff]
    %v336 = vld [vmem:[#allocation4 + $0xf0] sm:$0xff]
    %v337 = vld [vmem:[#allocation4 + $0xf8] sm:$0xff]
    %v338 = vld [vmem:[#allocation4 + $0x100] sm:$0xff]
    %v339 = vld [vmem:[#allocation4 + $0x108] sm:$0xff]
    %v340 = vld [vmem:[#allocation4 + $0x110] sm:$0xff]
    %v341 = vld [vmem:[#allocation4 + $0x118] sm:$0xff]
    %v342 = vld [vmem:[#allocation4 + $0x120] sm:$0xff]
    %v343 = vld [vmem:[#allocation4 + $0x128] sm:$0xff]
    %v344 = vld [vmem:[#allocation4 + $0x130] sm:$0xff]
    %v345 = vld [vmem:[#allocation4 + $0x138] sm:$0xff]
    %v346 = vld [vmem:[#allocation4 + $0x140] sm:$0xff]
    %v347 = vld [vmem:[#allocation4 + $0x148] sm:$0xff]
    %v348 = vld [vmem:[#allocation4 + $0x150] sm:$0xff]
    %v349 = vld [vmem:[#allocation4 + $0x158] sm:$0xff]
    %v350 = vld [vmem:[#allocation4 + $0x160] sm:$0xff]
    %v351 = vld [vmem:[#allocation4 + $0x168] sm:$0xff]
    %v352 = vld [vmem:[#allocation4 + $0x170] sm:$0xff]
    %v353 = vld [vmem:[#allocation4 + $0x178] sm:$0xff]
    %v354 = vld [vmem:[%s8] sm:$0x3f]
    %v356 = vperm.slane %v354, 0
    %v357 = vperm.slane %v354, 1
    %v358 = vperm.slane %v354, 2
    %v359 = vperm.slane %v354, 3
    %v360 = vperm.slane %v354, 4
    %v361 = vperm.slane %v354, 5
    %v416 = vunpack.c.l.b16 %v306
    %v417 = vunpack.c.h.b16 %v306
    %v418 = vunpack.c.l.b16 %v307
    %v419 = vunpack.c.h.b16 %v307
    %v420 = vunpack.c.l.b16 %v308
    %v421 = vunpack.c.h.b16 %v308
    %v422 = vunpack.c.l.b16 %v309
    %v423 = vunpack.c.h.b16 %v309
    %v424 = vunpack.c.l.b16 %v310
    %v425 = vunpack.c.h.b16 %v310
    %v426 = vunpack.c.l.b16 %v311
    %v427 = vunpack.c.h.b16 %v311
    %v428 = vunpack.c.l.b16 %v312
    %v429 = vunpack.c.h.b16 %v312
    %v430 = vunpack.c.l.b16 %v313
    %v431 = vunpack.c.h.b16 %v313
    %v432 = vunpack.c.l.b16 %v314
    %v433 = vunpack.c.h.b16 %v314
    %v434 = vunpack.c.l.b16 %v315
    %v435 = vunpack.c.h.b16 %v315
    %v436 = vunpack.c.l.b16 %v316
    %v437 = vunpack.c.h.b16 %v316
    %v438 = vunpack.c.l.b16 %v317
    %v439 = vunpack.c.h.b16 %v317
    %v440 = vunpack.c.l.b16 %v318
    %v441 = vunpack.c.h.b16 %v318
    %v442 = vunpack.c.l.b16 %v319
    %v443 = vunpack.c.h.b16 %v319
    %v444 = vunpack.c.l.b16 %v320
    %v445 = vunpack.c.h.b16 %v320
    %v446 = vunpack.c.l.b16 %v321
    %v447 = vunpack.c.h.b16 %v321
    %v448 = vunpack.c.l.b16 %v322
    %v449 = vunpack.c.h.b16 %v322
    %v450 = vunpack.c.l.b16 %v323
    %v451 = vunpack.c.h.b16 %v323
    %v452 = vunpack.c.l.b16 %v324
    %v453 = vunpack.c.h.b16 %v324
    %v454 = vunpack.c.l.b16 %v325
    %v455 = vunpack.c.h.b16 %v325
    %v456 = vunpack.c.l.b16 %v326
    %v457 = vunpack.c.h.b16 %v326
    %v458 = vunpack.c.l.b16 %v327
    %v459 = vunpack.c.h.b16 %v327
    %v460 = vunpack.c.l.b16 %v328
    %v461 = vunpack.c.h.b16 %v328
    %v462 = vunpack.c.l.b16 %v329
    %v463 = vunpack.c.h.b16 %v329
    %v464 = vunpack.c.l.b16 %v330
    %v465 = vunpack.c.h.b16 %v330
    %v466 = vunpack.c.l.b16 %v331
    %v467 = vunpack.c.h.b16 %v331
    %v468 = vunpack.c.l.b16 %v332
    %v469 = vunpack.c.h.b16 %v332
    %v470 = vunpack.c.l.b16 %v333
    %v471 = vunpack.c.h.b16 %v333
    %v472 = vunpack.c.l.b16 %v334
    %v473 = vunpack.c.h.b16 %v334
    %v474 = vunpack.c.l.b16 %v335
    %v475 = vunpack.c.h.b16 %v335
    %v476 = vunpack.c.l.b16 %v336
    %v477 = vunpack.c.h.b16 %v336
    %v478 = vunpack.c.l.b16 %v337
    %v479 = vunpack.c.h.b16 %v337
    %v480 = vunpack.c.l.b16 %v338
    %v481 = vunpack.c.h.b16 %v338
    %v482 = vunpack.c.l.b16 %v339
    %v483 = vunpack.c.h.b16 %v339
    %v484 = vunpack.c.l.b16 %v340
    %v485 = vunpack.c.h.b16 %v340
    %v486 = vunpack.c.l.b16 %v341
    %v487 = vunpack.c.h.b16 %v341
    %v488 = vunpack.c.l.b16 %v342
    %v489 = vunpack.c.h.b16 %v342
    %v490 = vunpack.c.l.b16 %v343
    %v491 = vunpack.c.h.b16 %v343
    %v492 = vunpack.c.l.b16 %v344
    %v493 = vunpack.c.h.b16 %v344
    %v494 = vunpack.c.l.b16 %v345
    %v495 = vunpack.c.h.b16 %v345
    %v496 = vunpack.c.l.b16 %v346
    %v497 = vunpack.c.h.b16 %v346
    %v498 = vunpack.c.l.b16 %v347
    %v499 = vunpack.c.h.b16 %v347
    %v500 = vunpack.c.l.b16 %v348
    %v501 = vunpack.c.h.b16 %v348
    %v502 = vunpack.c.l.b16 %v349
    %v503 = vunpack.c.h.b16 %v349
    %v504 = vunpack.c.l.b16 %v350
    %v505 = vunpack.c.h.b16 %v350
    %v506 = vunpack.c.l.b16 %v351
    %v507 = vunpack.c.h.b16 %v351
    %v508 = vunpack.c.l.b16 %v352
    %v509 = vunpack.c.h.b16 %v352
    %v510 = vunpack.c.l.b16 %v353
    %v511 = vunpack.c.h.b16 %v353
    %v512 = vpack.c.b16 %v422, %v416
    %v513 = vpack.c.b16 %v423, %v417
    %v514 = vpack.c.b16 %v424, %v418
    %v515 = vpack.c.b16 %v425, %v419
    %v516 = vpack.c.b16 %v426, %v420
    %v517 = vpack.c.b16 %v427, %v421
    %v518 = vpack.c.b16 %v434, %v428
    %v519 = vpack.c.b16 %v435, %v429
    %v520 = vpack.c.b16 %v436, %v430
    %v521 = vpack.c.b16 %v437, %v431
    %v522 = vpack.c.b16 %v438, %v432
    %v523 = vpack.c.b16 %v439, %v433
    %v524 = vpack.c.b16 %v446, %v440
    %v525 = vpack.c.b16 %v447, %v441
    %v526 = vpack.c.b16 %v448, %v442
    %v527 = vpack.c.b16 %v449, %v443
    %v528 = vpack.c.b16 %v450, %v444
    %v529 = vpack.c.b16 %v451, %v445
    %v530 = vpack.c.b16 %v458, %v452
    %v531 = vpack.c.b16 %v459, %v453
    %v532 = vpack.c.b16 %v460, %v454
    %v533 = vpack.c.b16 %v461, %v455
    %v534 = vpack.c.b16 %v462, %v456
    %v535 = vpack.c.b16 %v463, %v457
    %v536 = vpack.c.b16 %v470, %v464
    %v537 = vpack.c.b16 %v471, %v465
    %v538 = vpack.c.b16 %v472, %v466
    %v539 = vpack.c.b16 %v473, %v467
    %v540 = vpack.c.b16 %v474, %v468
    %v541 = vpack.c.b16 %v475, %v469
    %v542 = vpack.c.b16 %v482, %v476
    %v543 = vpack.c.b16 %v483, %v477
    %v544 = vpack.c.b16 %v484, %v478
    %v545 = vpack.c.b16 %v485, %v479
    %v546 = vpack.c.b16 %v486, %v480
    %v547 = vpack.c.b16 %v487, %v481
    %v548 = vpack.c.b16 %v494, %v488
    %v549 = vpack.c.b16 %v495, %v489
    %v550 = vpack.c.b16 %v496, %v490
    %v551 = vpack.c.b16 %v497, %v491
    %v552 = vpack.c.b16 %v498, %v492
    %v553 = vpack.c.b16 %v499, %v493
    %v554 = vpack.c.b16 %v506, %v500
    %v555 = vpack.c.b16 %v507, %v501
    %v556 = vpack.c.b16 %v508, %v502
    %v557 = vpack.c.b16 %v509, %v503
    %v558 = vpack.c.b16 %v510, %v504
    %v559 = vpack.c.b16 %v511, %v505
    %608 = vmatpush.bf16.msra.mxu0 %v554
    %609 = vmatpush.bf16.msra.mxu0 %v548
    %610 = vmatpush.bf16.msra.mxu0 %v542
    %611 = vmatpush.bf16.msra.mxu0 %v536
    %612 = vmatpush.bf16.msra.mxu0 %v530
    %613 = vmatpush.bf16.msra.mxu0 %v524
    %614 = vmatpush.bf16.msra.mxu0 %v518
    %615 = vmatpush.bf16.msra.mxu0 %v512
    %616 = vmatmul.bf16.gmra.mxu0 %v305
    %v617 = vpop.f32.mrf.mxu0
    %v618 = vadd.f32 %v356, %v617
    %v619 = vpop.f32.mrf.mxu0
    %620 = vdwg.mxu0
    %621 = vmatpush.bf16.msra.mxu0 %v555
    %622 = vmatpush.bf16.msra.mxu0 %v549
    %623 = vmatpush.bf16.msra.mxu0 %v543
    %624 = vmatpush.bf16.msra.mxu0 %v537
    %625 = vmatpush.bf16.msra.mxu0 %v531
    %626 = vmatpush.bf16.msra.mxu0 %v525
    %627 = vmatpush.bf16.msra.mxu0 %v519
    %628 = vmatpush.bf16.msra.mxu0 %v513
    %629 = vmatmul.bf16.gmra.mxu0 %v305
    %v630 = vpop.f32.mrf.mxu0
    %v631 = vadd.f32 %v357, %v630
    %v632 = vpop.f32.mrf.mxu0
    %633 = vdwg.mxu0
    %634 = vmatpush.bf16.msra.mxu0 %v556
    %635 = vmatpush.bf16.msra.mxu0 %v550
    %636 = vmatpush.bf16.msra.mxu0 %v544
    %637 = vmatpush.bf16.msra.mxu0 %v538
    %638 = vmatpush.bf16.msra.mxu0 %v532
    %639 = vmatpush.bf16.msra.mxu0 %v526
    %640 = vmatpush.bf16.msra.mxu0 %v520
    %641 = vmatpush.bf16.msra.mxu0 %v514
    %642 = vmatmul.bf16.gmra.mxu0 %v305
    %v643 = vpop.f32.mrf.mxu0
    %v644 = vadd.f32 %v358, %v643
    %v645 = vpop.f32.mrf.mxu0
    %646 = vdwg.mxu0
    %647 = vmatpush.bf16.msra.mxu0 %v557
    %648 = vmatpush.bf16.msra.mxu0 %v551
    %649 = vmatpush.bf16.msra.mxu0 %v545
    %650 = vmatpush.bf16.msra.mxu0 %v539
    %651 = vmatpush.bf16.msra.mxu0 %v533
    %652 = vmatpush.bf16.msra.mxu0 %v527
    %653 = vmatpush.bf16.msra.mxu0 %v521
    %654 = vmatpush.bf16.msra.mxu0 %v515
    %655 = vmatmul.bf16.gmra.mxu0 %v305
    %v656 = vpop.f32.mrf.mxu0
    %v657 = vadd.f32 %v359, %v656
    %v658 = vpop.f32.mrf.mxu0
    %659 = vdwg.mxu0
    %660 = vmatpush.bf16.msra.mxu0 %v558
    %661 = vmatpush.bf16.msra.mxu0 %v552
    %662 = vmatpush.bf16.msra.mxu0 %v546
    %663 = vmatpush.bf16.msra.mxu0 %v540
    %664 = vmatpush.bf16.msra.mxu0 %v534
    %665 = vmatpush.bf16.msra.mxu0 %v528
    %666 = vmatpush.bf16.msra.mxu0 %v522
    %667 = vmatpush.bf16.msra.mxu0 %v516
    %668 = vmatmul.bf16.gmra.mxu0 %v305
    %v669 = vpop.f32.mrf.mxu0
    %v670 = vadd.f32 %v360, %v669
    %v671 = vpop.f32.mrf.mxu0
    %672 = vdwg.mxu0
    %673 = vmatpush.bf16.msra.mxu0 %v559
    %674 = vmatpush.bf16.msra.mxu0 %v553
    %675 = vmatpush.bf16.msra.mxu0 %v547
    %676 = vmatpush.bf16.msra.mxu0 %v541
    %677 = vmatpush.bf16.msra.mxu0 %v535
    %678 = vmatpush.bf16.msra.mxu0 %v529
    %679 = vmatpush.bf16.msra.mxu0 %v523
    %680 = vmatpush.bf16.msra.mxu0 %v517
    %681 = vmatmul.bf16.gmra.mxu0 %v305
    %v682 = vpop.f32.mrf.mxu0
    %v683 = vadd.f32 %v361, %v682
    %v684 = vpop.f32.mrf.mxu0
    %685 = vdwg.mxu0
    %v686 = vmax.f32 %v618, 0.0
    %v687 = vmax.f32 %v631, 0.0
    %v688 = vmax.f32 %v644, 0.0
    %v689 = vmax.f32 %v657, 0.0
    %v690 = vmax.f32 %v670, 0.0
    %v691 = vmax.f32 %v683, 0.0
    %v692 = vpack.c.bf16 %v687, %v686
    %v693 = vpack.c.bf16 %v689, %v688
    %v694 = vpack.c.bf16 %v691, %v690
    %v698 = vrot.slane %v692, 2
    %v699 = vrot.slane %v693, 4
    %v700 = vrot.slane %v693, 6
    %v701 = vrot.slane %v694, 2
    %vm702 = vcmask 1041408
    %v705 = vsel %vm702, %v692, %v698
    %vm706 = vcmask 1045508
    %v709 = vsel %vm706, %v699, %v700
    %vm710 = vcmask 1043456
    %v711 = vsel %vm710, %v705, %v709
    %v714 = vsel %vm702, %v694, %v701
    %vm715 = vcmask 1043458
    %v716 = vsel %vm715, %v692, %v698
    %vm717 = vcmask 1045504
    %v718 = vsel %vm717, %v700, %v699
    %vm719 = vcmask 1045506
    %v720 = vsel %vm719, %v716, %v718
    %v722 = vrot.slane %v720, 2
    %v723 = vsel %vm715, %v694, %v701
    %v725 = vrot.slane %v723, 2
    %730 = vst [vmem:[#allocation6] sm:$0xff] %v711
    %731 = vst [vmem:[#allocation6 + $0x8] sm:$0xf] %v714
    %732 = vst [vmem:[#allocation6 + $0xc] sm:$0xff] %v722
    %733 = vst [vmem:[#allocation6 + $0x14] sm:$0xf] %v725
    // Predicated region
    $region46: #{_lambda_.1} parent=1 // pred_check
      _
    $region47: #{_lambda_.1} parent=1 // pred_check_branch
      %735 = sbr.rel (0) target = $region49
    $region48: #{_lambda_.1} parent=1 // pred_region
      // Predicated region
      $region50: #{_lambda_.1} parent=48 // pred_check
        _
      $region51: #{_lambda_.1} parent=48 // pred_check_branch
        %737 = sbr.rel (0) target = $region53
      $region52: #{_lambda_.1} parent=48 // pred_region
        // Predicated region
        $region54: #{_lambda_.1} parent=52 // pred_check
          _
        $region55: #{_lambda_.1} parent=52 // pred_check_branch
          %739 = sbr.rel (0) target = $region57
        $region56: #{_lambda_.1} parent=52 // pred_region
          %s740 = scalar_lea.vmem [#allocation6], 8
          %s741 = scalar_lea.vmem %s9, 8
          loop: start=0, step=1, limit=1
          $region58: #{_lambda_.1} parent=56 // loop_pre_header
            _
          $region59: #{_lambda_.1} parent=56 // loop_header
            %s743 = sphi 0, %s747
            %p744 = scmp.ge.s32.totalorder %s743, 1
            %s748 = sphi [#allocation6], [#allocation6]
            %s749 = sphi %s9, %s9
          $region60: #{_lambda_.1} parent=56 // loop_header_branch
            %746 = sbr.rel (%p744) target = $region64
          $region61: #{_lambda_.1} parent=56 // loop_body
            %v750 = vld [vmem:[%s748] sm:$0xff]
            %751 = vst [vmem:[%s749] sm:$0xff] %v750
          $region62: #{_lambda_.1} parent=56 // loop_footer
            %s747 = sadd.s32 1, %s743
          $region63: #{_lambda_.1} parent=56 // loop_footer_branch
            %742 = sbr.rel target = $region59
          $region64: #{_lambda_.1} parent=56 // loop_exit
            _
          %s753 = ssub.s32 16, 1
          loop: start=0, step=1, limit=1
          $region65: #{_lambda_.1} parent=56 // loop_pre_header
            _
          $region66: #{_lambda_.1} parent=56 // loop_header
            %s755 = sphi 0, %s759
            %p756 = scmp.ge.s32.totalorder %s755, 1
            %s760 = sphi %s740, %s740
            %s761 = sphi %s741, %s741
          $region67: #{_lambda_.1} parent=56 // loop_header_branch
            %758 = sbr.rel (%p756) target = $region71
          $region68: #{_lambda_.1} parent=56 // loop_body
            %v762 = vld [vmem:[%s760] sm:%s753]
            %763 = vst [vmem:[%s761] sm:%s753] %v762
          $region69: #{_lambda_.1} parent=56 // loop_footer
            %s759 = sadd.s32 1, %s755
          $region70: #{_lambda_.1} parent=56 // loop_footer_branch
            %754 = sbr.rel target = $region66
          $region71: #{_lambda_.1} parent=56 // loop_exit
            _
        $region57: #{_lambda_.1} parent=52 // pred_fallthru
          _
      $region53: #{_lambda_.1} parent=48 // pred_fallthru
        _
      %764 = vnop
    $region49: #{_lambda_.1} parent=1 // pred_fallthru
      _
    // Predicated region
    $region72: #{_lambda_.1} parent=1 // pred_check
      _
    $region73: #{_lambda_.1} parent=1 // pred_check_branch
      %766 = sbr.rel (0) target = $region75
    $region74: #{_lambda_.1} parent=1 // pred_region
      _
    $region75: #{_lambda_.1} parent=1 // pred_fallthru
      _
    %767 = vsyncpa [#allocation3], 1
    %768 = vsyncpa [#allocation5], 1

</llo_original>
